<compile_context>
chip_gen: v6e
topology: v6e:2x2x1
jax: 0.10.0
libtpu: 0.0.40
codegen_flags: <defaults>
</compile_context>

<pallas_src>
import jax
import jax.numpy as jnp
from jax.experimental import pallas as pl
from jax.experimental.pallas import tpu as pltpu


def _maxpool2x2_kernel(x_ref, sel_ref, o_ref):
    # x_ref:   (tr, 2*We)  -- tr pooling strips; lanes = [row 2i | row 2i+1]
    # sel_ref: (We, 2*Wo)  -- one-hot picks: cols [0,Wo) select even lanes,
    #                         cols [Wo,2*Wo) select odd lanes of the strip
    # o_ref:   (tr, Wo)
    we = sel_ref.shape[0]
    wo = o_ref.shape[1]

    x = x_ref[...].astype(jnp.float32)                       # (tr, 2*We)
    m = jnp.maximum(x[:, :we], x[:, we:])                     # vertical pair max
    y = jnp.dot(m, sel_ref[...], preferred_element_type=jnp.float32)  # (tr, 2*Wo)
    o_ref[...] = jnp.maximum(y[:, :wo], y[:, wo:]).astype(o_ref.dtype)


@jax.jit
def maxpool2x2(x):
    """PyTorch nn.MaxPool2d(2, 2) forward for NCHW float inputs."""
    N, C, H, W = x.shape
    Ho, Wo = H // 2, W // 2
    assert Ho >= 1 and Wo >= 1, (H, W)
    He, We = 2 * Ho, 2 * Wo

    xc = x[:, :, :He, :We]                 # floor crop (no-op for even H, W)
    R = N * C * Ho
    x2 = xc.reshape(R, 2 * We)             # zero-copy view for even H, W

    # One-hot selection matrix: column j<Wo picks lane 2j (even), column
    # Wo+j picks lane 2j+1 (odd).  Exact 0/1 picks on the MXU.
    k = jax.lax.broadcasted_iota(jnp.int32, (We, 2 * Wo), 0)
    j = jax.lax.broadcasted_iota(jnp.int32, (We, 2 * Wo), 1)
    target = jnp.where(j < Wo, 2 * j, 2 * (j - Wo) + 1)
    sel = (k == target).astype(jnp.float32)

    # Row-tile size: ~2 MiB of f32 working set per input block (including the
    # 128-lane padding), rounded to a multiple of 8 sublanes.  Last dims of
    # every block equal the full array extent, so the (8,128) rule holds for
    # any We / Wo; partial edge row-blocks are safe (rows independent).
    padded_lanes = ((2 * We + 127) // 128) * 128
    tr = max(1, (2 << 20) // (padded_lanes * 4))
    tr = min(tr, R)
    if R >= 8:
        tr = max(8, (tr // 8) * 8)
    grid = (pl.cdiv(R, tr),)

    out = pl.pallas_call(
        _maxpool2x2_kernel,
        out_shape=jax.ShapeDtypeStruct((R, Wo), x.dtype),
        grid_spec=pltpu.PrefetchScalarGridSpec(
            num_scalar_prefetch=0,
            grid=grid,
            in_specs=[
                pl.BlockSpec((tr, 2 * We), lambda i: (i, 0)),
                pl.BlockSpec((We, 2 * Wo), lambda i: (0, 0)),
            ],
            out_specs=pl.BlockSpec((tr, Wo), lambda i: (i, 0)),
        ),
        compiler_params=pltpu.CompilerParams(
            dimension_semantics=("parallel",),
            vmem_limit_bytes=32 << 20,
        ),
    )(x2, sel)
    return out.reshape(N, C, Ho, Wo)


def _ref_maxpool2x2(x):
    N, C, H, W = x.shape
    Ho, Wo = H // 2, W // 2
    xc = x[:, :, :2 * Ho, :2 * Wo]
    return jnp.max(xc.reshape(N, C, Ho, 2, Wo, 2), axis=(3, 5))


if __name__ == "__main__":
    key = jax.random.PRNGKey(0)

    # Main check: shape consistent with the module's typical use.
    x = jax.random.normal(key, (2, 4, 16, 16), jnp.float32)
    out = maxpool2x2(x)
    jax.block_until_ready(out)
    assert out.shape == (2, 4, 8, 8), out.shape
    ref = _ref_maxpool2x2(x)
    assert bool(jnp.all(jnp.isfinite(out)))
    assert bool(jnp.allclose(out, ref, atol=1e-6, rtol=1e-6)), float(
        jnp.max(jnp.abs(out - ref)))

    # Secondary check: odd spatial dims (floor mode) + partial row blocks.
    x2 = jax.random.normal(jax.random.PRNGKey(1), (1, 3, 9, 13), jnp.float32)
    out2 = maxpool2x2(x2)
    jax.block_until_ready(out2)
    assert out2.shape == (1, 3, 4, 6), out2.shape
    ref2 = _ref_maxpool2x2(x2)
    assert bool(jnp.allclose(out2, ref2, atol=1e-6, rtol=1e-6)), float(
        jnp.max(jnp.abs(out2 - ref2)))

    print("KERNEL_OK")
</pallas_src>

<mosaic_0001>
module attributes {stable_mosaic.version = 11 : i64} {
  func.func @_maxpool2x2_kernel(%arg0: i32, %arg1: memref<64x32xf32, #tpu.memory_space<vmem>>, %arg2: memref<16x16xf32, #tpu.memory_space<vmem>>, %arg3: memref<64x8xf32, #tpu.memory_space<vmem>>) attributes {dimension_semantics = [#tpu.dimension_semantics<parallel>], iteration_bounds = array<i64: 1>, scalar_prefetch = 0 : i64, scratch_operands = 0 : i64, tpu.core_type = #tpu.core_type<tc>, window_params = [{transform_indices = @transform_0, window_bounds = array<i64: 64, 32>}, {pipeline_mode = #tpu.pipeline_mode<synchronous>, transform_indices = @transform_1, window_bounds = array<i64: 16, 16>}, {transform_indices = @transform_2, window_bounds = array<i64: 64, 8>}]} {
    %c0 = arith.constant 0 : index
    %c0_0 = arith.constant 0 : index
    %0 = vector.load %arg1[%c0, %c0_0] : memref<64x32xf32, #tpu.memory_space<vmem>>, vector<64x32xf32>
    %1 = vector.extract_strided_slice %0 {offsets = [0, 0], sizes = [64, 16], strides = [1, 1]} : vector<64x32xf32> to vector<64x16xf32>
    %2 = vector.extract_strided_slice %0 {offsets = [0, 16], sizes = [64, 16], strides = [1, 1]} : vector<64x32xf32> to vector<64x16xf32>
    %3 = arith.maximumf %1, %2 : vector<64x16xf32>
    %c0_1 = arith.constant 0 : index
    %c0_2 = arith.constant 0 : index
    %4 = vector.load %arg2[%c0_1, %c0_2] : memref<16x16xf32, #tpu.memory_space<vmem>>, vector<16x16xf32>
    %cst = arith.constant dense<0.000000e+00> : vector<64x16xf32>
    %5 = tpu.matmul %3, %4, %cst {dimension_numbers = #tpu.dot_dimension_numbers<[1], [0], [0], [1], [0, 0, 1, 1], [], []>} : vector<64x16xf32>, vector<16x16xf32>, vector<64x16xf32> -> vector<64x16xf32>
    %6 = vector.extract_strided_slice %5 {offsets = [0, 0], sizes = [64, 8], strides = [1, 1]} : vector<64x16xf32> to vector<64x8xf32>
    %7 = vector.extract_strided_slice %5 {offsets = [0, 8], sizes = [64, 8], strides = [1, 1]} : vector<64x16xf32> to vector<64x8xf32>
    %8 = arith.maximumf %6, %7 : vector<64x8xf32>
    %c0_3 = arith.constant 0 : index
    %c0_4 = arith.constant 0 : index
    %9 = vector.load %arg3[%c0_3, %c0_4] : memref<64x8xf32, #tpu.memory_space<vmem>>, vector<64x8xf32>
    tpu.vector_store %arg3[%c0_3, %c0_4], %8 {strides = array<i32>} : memref<64x8xf32, #tpu.memory_space<vmem>>, vector<64x8xf32>,
    return
  }
  func.func @transform_0(%arg0: i32) -> (i32, i32) {
    %c0_i32 = arith.constant 0 : i32
    %c0_i32_0 = arith.constant 0 : i32
    return %arg0, %c0_i32 : i32, i32
  }
  func.func @transform_1(%arg0: i32) -> (i32, i32) {
    %c0_i32 = arith.constant 0 : i32
    %c0_i32_0 = arith.constant 0 : i32
    %c0_i32_1 = arith.constant 0 : i32
    return %c0_i32, %c0_i32_0 : i32, i32
  }
  func.func @transform_2(%arg0: i32) -> (i32, i32) {
    %c0_i32 = arith.constant 0 : i32
    %c0_i32_0 = arith.constant 0 : i32
    return %arg0, %c0_i32 : i32, i32
  }
}

</mosaic_0001>

<llo_original>
// kernel: maxpool2x2.1
$region0: #{maxpool2x2.1}
  #allocation0 [shape = 'u32[]', space=smem, size = 0x4, offset = 0x4, fixed_abs, tag = 'smem constant byte address 0x4 - core index']
  #allocation1 [shape = 'u32[144,128]{1,0:T(1,128)}', space=vmem, size = 0x12000, scoped, tag = 'internal scratch']
  %s0 = inlined_call_operand.vmem [shape: f32[64,32], index: 0, kind: input, shape index: {}]
  %s1 = inlined_call_operand.vmem [shape: f32[16,16], index: 1, kind: input, shape index: {}]
  %s2 = inlined_call_operand.hbm [shape: f32[64,8], index: 2, kind: output, shape index: {}]
  %s3 = sld [smem:[#allocation0]]
  $region18: #{maxpool2x2.1} parent=0
    _
  %s5 = ssub.s32 1, %s3
  %s6 = scalar_select 0, %s5, %s3
  $region1: #{maxpool2x2.1} parent=0
    #allocation2 [shape = 'u8[32768]{0}', space=vmem, size = 0x8000, scoped, tag = 'output window, operand 0, single buffered']
    #allocation3 [shape = 's32[1]{0}', space=sflag, size = 0x4, scoped, tag = 'scoped memory for maxpool2x2.1']
    %7 = vsyncpa [#allocation3], 0
    // Predicated region
    $region2: #{maxpool2x2.1} parent=1 // pred_check
      _
    $region3: #{maxpool2x2.1} parent=1 // pred_check_branch
      %9 = sbr.rel (0) target = $region5
    $region4: #{maxpool2x2.1} parent=1 // pred_region
      _
    $region5: #{maxpool2x2.1} parent=1 // pred_fallthru
      _
    // Predicated region
    $region6: #{maxpool2x2.1} parent=1 // pred_check
      _
    $region7: #{maxpool2x2.1} parent=1 // pred_check_branch
      %11 = sbr.rel (0) target = $region9
    $region8: #{maxpool2x2.1} parent=1 // pred_region
      _
    $region9: #{maxpool2x2.1} parent=1 // pred_fallthru
      _
    %v12 = vld [vmem:[%s0] sm:$0xff]
    %v13 = vld [vmem:[%s0 + $0x8] sm:$0xff]
    %v14 = vld [vmem:[%s0 + $0x10] sm:$0xff]
    %v15 = vld [vmem:[%s0 + $0x18] sm:$0xff]
    %v16 = vld [vmem:[%s0 + $0x20] sm:$0xff]
    %v17 = vld [vmem:[%s0 + $0x28] sm:$0xff]
    %v18 = vld [vmem:[%s0 + $0x30] sm:$0xff]
    %v19 = vld [vmem:[%s0 + $0x38] sm:$0xff]
    %28 = vrot.lane.b32.xlu0 %v12, 112
    %v29 = vpop.permute.xlu0 %28
    %30 = vrot.lane.b32.xlu0 %v13, 112
    %v31 = vpop.permute.xlu0 %30
    %32 = vrot.lane.b32.xlu0 %v14, 112
    %v33 = vpop.permute.xlu0 %32
    %34 = vrot.lane.b32.xlu0 %v15, 112
    %v35 = vpop.permute.xlu0 %34
    %36 = vrot.lane.b32.xlu0 %v16, 112
    %v37 = vpop.permute.xlu0 %36
    %38 = vrot.lane.b32.xlu0 %v17, 112
    %v39 = vpop.permute.xlu0 %38
    %40 = vrot.lane.b32.xlu0 %v18, 112
    %v41 = vpop.permute.xlu0 %40
    %42 = vrot.lane.b32.xlu0 %v19, 112
    %v43 = vpop.permute.xlu0 %42
    %v52 = vmax.f32 %v12, %v29
    %v53 = vmax.f32 %v13, %v31
    %v54 = vmax.f32 %v14, %v33
    %v55 = vmax.f32 %v15, %v35
    %v56 = vmax.f32 %v16, %v37
    %v57 = vmax.f32 %v17, %v39
    %v58 = vmax.f32 %v18, %v41
    %v59 = vmax.f32 %v19, %v43
    %v60 = vld [vmem:[%s1] sm:$0xff]
    %v61 = vld [vmem:[%s1 + $0x8] sm:$0xff]
    %vm62 = vcmask 130048
    %v64 = vsel %vm62, %v52, 0
    %v67 = vsel %vm62, %v53, 0
    %v70 = vsel %vm62, %v54, 0
    %v73 = vsel %vm62, %v55, 0
    %v76 = vsel %vm62, %v56, 0
    %v79 = vsel %vm62, %v57, 0
    %v82 = vsel %vm62, %v58, 0
    %v85 = vsel %vm62, %v59, 0
    %87 = vmatprep.subr.mxu0 0.0
    %88 = vmatpush1.msra.mxu0 0.0
    %89 = vmatprep.subr.mxu0 0.0
    %90 = vmatpush1.msra.mxu0 0.0
    %91 = vmatprep.subr.mxu0 0.0
    %92 = vmatpush1.msra.mxu0 0.0
    %93 = vmatprep.subr.mxu0 0.0
    %94 = vmatpush1.msra.mxu0 0.0
    %95 = vmatprep.subr.mxu0 0.0
    %96 = vmatpush1.msra.mxu0 0.0
    %97 = vmatprep.subr.mxu0 0.0
    %98 = vmatpush1.msra.mxu0 0.0
    %99 = vmatprep.subr.mxu0 0.0
    %100 = vmatpush1.msra.mxu0 0.0
    %101 = vmatprep.subr.mxu0 0.0
    %102 = vmatpush1.msra.mxu0 0.0
    %103 = vmatprep.subr.mxu0 0.0
    %104 = vmatpush1.msra.mxu0 0.0
    %105 = vmatprep.subr.mxu0 0.0
    %106 = vmatpush1.msra.mxu0 0.0
    %107 = vmatprep.subr.mxu0 0.0
    %108 = vmatpush1.msra.mxu0 0.0
    %109 = vmatprep.subr.mxu0 0.0
    %110 = vmatpush1.msra.mxu0 0.0
    %111 = vmatprep.subr.mxu0 0.0
    %112 = vmatpush1.msra.mxu0 0.0
    %113 = vmatprep.subr.mxu0 0.0
    %114 = vmatpush1.msra.mxu0 0.0
    %115 = vmatprep.subr.mxu0 0.0
    %116 = vmatpush1.msra.mxu0 %v61
    %117 = vmatprep.subr.mxu0 0.0
    %118 = vmatpush1.msra.mxu0 %v60
    %119 = vmatprep.subr.mxu0 0.0
    %120 = vmatpush2.msra.mxu0 0.0
    %121 = vmatprep.subr.mxu0 0.0
    %122 = vmatpush2.msra.mxu0 0.0
    %123 = vmatprep.subr.mxu0 0.0
    %124 = vmatpush2.msra.mxu0 0.0
    %125 = vmatprep.subr.mxu0 0.0
    %126 = vmatpush2.msra.mxu0 0.0
    %127 = vmatprep.subr.mxu0 0.0
    %128 = vmatpush2.msra.mxu0 0.0
    %129 = vmatprep.subr.mxu0 0.0
    %130 = vmatpush2.msra.mxu0 0.0
    %131 = vmatprep.subr.mxu0 0.0
    %132 = vmatpush2.msra.mxu0 0.0
    %133 = vmatprep.subr.mxu0 0.0
    %134 = vmatpush2.msra.mxu0 0.0
    %135 = vmatprep.subr.mxu0 0.0
    %136 = vmatpush2.msra.mxu0 0.0
    %137 = vmatprep.subr.mxu0 0.0
    %138 = vmatpush2.msra.mxu0 0.0
    %139 = vmatprep.subr.mxu0 0.0
    %140 = vmatpush2.msra.mxu0 0.0
    %141 = vmatprep.subr.mxu0 0.0
    %142 = vmatpush2.msra.mxu0 0.0
    %143 = vmatprep.subr.mxu0 0.0
    %144 = vmatpush2.msra.mxu0 0.0
    %145 = vmatprep.subr.mxu0 0.0
    %146 = vmatpush2.msra.mxu0 0.0
    %147 = vmatprep.subr.mxu0 0.0
    %148 = vmatpush2.msra.mxu0 0.0
    %149 = vmatprep.subr.mxu0 0.0
    %150 = vmatpush2.msra.mxu0 0.0
    %151 = vmatprep.mubr.f32.mxu0 0.0
    %152 = vmatmul.mubr.f32.gmra.mxu0 %v64
    %v153 = vpop.f32.mrf.mxu0
    %v154 = vadd.f32 0.0, %v153
    %v155 = vpop.f32.mrf.mxu0
    %156 = vmatprep.mubr.f32.mxu0 0.0
    %157 = vmatmul.mubr.f32.gmra.mxu0 %v67
    %v158 = vpop.f32.mrf.mxu0
    %v159 = vadd.f32 0.0, %v158
    %v160 = vpop.f32.mrf.mxu0
    %161 = vmatprep.mubr.f32.mxu0 0.0
    %162 = vmatmul.mubr.f32.gmra.mxu0 %v70
    %v163 = vpop.f32.mrf.mxu0
    %v164 = vadd.f32 0.0, %v163
    %v165 = vpop.f32.mrf.mxu0
    %166 = vmatprep.mubr.f32.mxu0 0.0
    %167 = vmatmul.mubr.f32.gmra.mxu0 %v73
    %v168 = vpop.f32.mrf.mxu0
    %v169 = vadd.f32 0.0, %v168
    %v170 = vpop.f32.mrf.mxu0
    %171 = vmatprep.mubr.f32.mxu0 0.0
    %172 = vmatmul.mubr.f32.gmra.mxu0 %v76
    %v173 = vpop.f32.mrf.mxu0
    %v174 = vadd.f32 0.0, %v173
    %v175 = vpop.f32.mrf.mxu0
    %176 = vmatprep.mubr.f32.mxu0 0.0
    %177 = vmatmul.mubr.f32.gmra.mxu0 %v79
    %v178 = vpop.f32.mrf.mxu0
    %v179 = vadd.f32 0.0, %v178
    %v180 = vpop.f32.mrf.mxu0
    %181 = vmatprep.mubr.f32.mxu0 0.0
    %182 = vmatmul.mubr.f32.gmra.mxu0 %v82
    %v183 = vpop.f32.mrf.mxu0
    %v184 = vadd.f32 0.0, %v183
    %v185 = vpop.f32.mrf.mxu0
    %186 = vmatprep.mubr.f32.mxu0 0.0
    %187 = vmatmul.mubr.f32.gmra.mxu0 %v85
    %v188 = vpop.f32.mrf.mxu0
    %v189 = vadd.f32 0.0, %v188
    %v190 = vpop.f32.mrf.mxu0
    %191 = vdwg.mxu0
    %200 = vrot.lane.b32.xlu0 %v154, 120
    %v201 = vpop.permute.xlu0 %200
    %202 = vrot.lane.b32.xlu0 %v159, 120
    %v203 = vpop.permute.xlu0 %202
    %204 = vrot.lane.b32.xlu0 %v164, 120
    %v205 = vpop.permute.xlu0 %204
    %206 = vrot.lane.b32.xlu0 %v169, 120
    %v207 = vpop.permute.xlu0 %206
    %208 = vrot.lane.b32.xlu0 %v174, 120
    %v209 = vpop.permute.xlu0 %208
    %210 = vrot.lane.b32.xlu0 %v179, 120
    %v211 = vpop.permute.xlu0 %210
    %212 = vrot.lane.b32.xlu0 %v184, 120
    %v213 = vpop.permute.xlu0 %212
    %214 = vrot.lane.b32.xlu0 %v189, 120
    %v215 = vpop.permute.xlu0 %214
    %v224 = vmax.f32 %v154, %v201
    %v225 = vmax.f32 %v159, %v203
    %v226 = vmax.f32 %v164, %v205
    %v227 = vmax.f32 %v169, %v207
    %v228 = vmax.f32 %v174, %v209
    %v229 = vmax.f32 %v179, %v211
    %v230 = vmax.f32 %v184, %v213
    %v231 = vmax.f32 %v189, %v215
    %vm232 = vcmask 64512
    %233 = vst.msk [vmem:[#allocation2] sm:$0xff] %vm232, %v224
    %234 = vst.msk [vmem:[#allocation2 + $0x8] sm:$0xff] %vm232, %v225
    %235 = vst.msk [vmem:[#allocation2 + $0x10] sm:$0xff] %vm232, %v226
    %236 = vst.msk [vmem:[#allocation2 + $0x18] sm:$0xff] %vm232, %v227
    %237 = vst.msk [vmem:[#allocation2 + $0x20] sm:$0xff] %vm232, %v228
    %238 = vst.msk [vmem:[#allocation2 + $0x28] sm:$0xff] %vm232, %v229
    %239 = vst.msk [vmem:[#allocation2 + $0x30] sm:$0xff] %vm232, %v230
    %240 = vst.msk [vmem:[#allocation2 + $0x38] sm:$0xff] %vm232, %v231
    // Predicated region
    $region10: #{maxpool2x2.1} parent=1 // pred_check
      _
    $region11: #{maxpool2x2.1} parent=1 // pred_check_branch
      %242 = sbr.rel (0) target = $region13
    $region12: #{maxpool2x2.1} parent=1 // pred_region
      %s244 = ssub.s32 1024, 1024
      %245 = vsyncadd [#allocation3], %s244
      %s246 = sshll.u32 [#allocation2], 4
      %s247 = int_to_ptr.vmem [resolvable:$true] %s246
      %252 = dma.vmem_to_hbm [thread:$0]  %s247, 1024, %s2, [#allocation3], 128, 128, 8
    $region13: #{maxpool2x2.1} parent=1 // pred_fallthru
      _
    // Predicated region
    $region14: #{maxpool2x2.1} parent=1 // pred_check
      _
    $region15: #{maxpool2x2.1} parent=1 // pred_check_branch
      %254 = sbr.rel (0) target = $region17
    $region16: #{maxpool2x2.1} parent=1 // pred_region
      %255 = dma.done [#allocation3], 1024
    $region17: #{maxpool2x2.1} parent=1 // pred_fallthru
      _
    %256 = vsyncpa [#allocation3], 1

</llo_original>
